<compile_context>
chip_gen: v7x
topology: tpu7x:2x2x1
jax: 0.10.0
libtpu: 0.0.40
codegen_flags: <defaults>
</compile_context>

<pallas_src>
import functools

import jax
import jax.numpy as jnp
from jax.experimental import pallas as pl
from jax.experimental.pallas import tpu as pltpu


_LANES = 128
_VMEM_LIMIT_BYTES = 48 * 1024 * 1024     # scoped VMEM; leaves headroom on v7x (64 MiB phys)
_BLOCK_DATA_BUDGET = 24 * 1024 * 1024    # target bytes for double-buffered in/out + fp32 temps


def _row_align(dtype):
    # 8 rows for 4-byte dtypes, 16 for bf16/fp16, 32 for 1-byte dtypes
    itemsize = jnp.dtype(dtype).itemsize
    return max(8, 32 // itemsize)


def _round_down(x, m):
    return (x // m) * m


def _round_up(x, m):
    return ((x + m - 1) // m) * m


def _pick_tile_rows(rows, d, itemsize, row_align, requested=None):
    """VMEM-budget-driven row tile: multiple of row_align, >=2 grid steps when possible."""
    # per-row VMEM estimate: in + out double-buffered (input dtype) + ~2 fp32 temporaries
    per_row = d * (4 * itemsize + 8)
    tile = max(row_align, _round_down(_BLOCK_DATA_BUDGET // max(per_row, 1), row_align))
    if requested is not None:
        req = max(row_align, _round_down(int(requested), row_align))
        tile = min(tile, req)
    if rows >= 2 * row_align:
        # keep at least two grid steps so both TensorCores get work (v7x megacore)
        half = _round_up((rows + 1) // 2, row_align)
        tile = min(tile, half)
    if tile >= rows:
        return rows                      # single full-array block (always a legal block shape)
    return tile


def _ln_rows_kernel(x_ref, o_ref, *, epsilon):
    """General path: each block row is one logical row; reduce over the lane axis."""
    x = x_ref[...].astype(jnp.float32)                       # (tile_rows, D)
    inv_d = 1.0 / x.shape[-1]
    mean = jnp.sum(x, axis=-1, keepdims=True) * inv_d        # one pass: sum(x), sum(x*x)
    ex2 = jnp.sum(x * x, axis=-1, keepdims=True) * inv_d
    var = jnp.maximum(ex2 - mean * mean, 0.0)                # clamp cancellation
    inv_std = jax.lax.rsqrt(var + epsilon)                   # EUP
    o_ref[...] = ((x - mean) * inv_std).astype(o_ref.dtype)


def _ln_packed_kernel(x_ref, s_ref, o_ref, *, epsilon):
    """Small-D path: each block row packs k logical rows along 128 lanes.

    Per-logical-row mean / E[x^2] are computed with a block-diagonal averaging
    matmul (MXU), keeping every load and store lane-dense.
    """
    x = x_ref[...].astype(jnp.float32)                       # (tile_g, k*D)
    s = s_ref[...]                                           # (k*D, k*D) averaging matrix
    mean = jnp.dot(x, s, preferred_element_type=jnp.float32,
                   precision=jax.lax.Precision.HIGHEST)
    ex2 = jnp.dot(x * x, s, preferred_element_type=jnp.float32,
                  precision=jax.lax.Precision.HIGHEST)
    var = jnp.maximum(ex2 - mean * mean, 0.0)
    inv_std = jax.lax.rsqrt(var + epsilon)
    o_ref[...] = ((x - mean) * inv_std).astype(o_ref.dtype)


def ln_v3(x, epsilon=1e-5, tile_rows=None):
    """LayerNorm (no affine) over the last axis, exactly like LN_v3.forward."""
    orig_shape = x.shape
    d = orig_shape[-1]
    x2 = x.reshape(-1, d)
    rows = x2.shape[0]
    itemsize = jnp.dtype(x.dtype).itemsize
    row_align = _row_align(x.dtype)

    # Small-D lane-packing path (e.g. D=32 -> pack 4 rows per 128-lane vreg row).
    pack = 1
    if d < _LANES and _LANES % d == 0:
        k = _LANES // d
        if rows % k == 0 and rows >= k:
            pack = k

    if pack > 1:
        g = rows // pack
        dp = pack * d                                        # == 128
        xp = x2.reshape(g, dp)                               # contiguous, no data movement
        tg = _pick_tile_rows(g, dp, itemsize, row_align, tile_rows)
        grid = (pl.cdiv(g, tg),)
        # block-diagonal averaging matrix: S[i, j] = 1/D if i, j belong to same logical row
        grp = jnp.arange(dp) // d
        sel = (grp[:, None] == grp[None, :]).astype(jnp.float32) * (1.0 / d)
        out = pl.pallas_call(
            functools.partial(_ln_packed_kernel, epsilon=epsilon),
            out_shape=jax.ShapeDtypeStruct((g, dp), x.dtype),
            grid_spec=pltpu.PrefetchScalarGridSpec(
                num_scalar_prefetch=0,
                grid=grid,
                in_specs=[pl.BlockSpec((tg, dp), lambda i: (i, 0)),
                          pl.BlockSpec((dp, dp), lambda i: (0, 0))],
                out_specs=pl.BlockSpec((tg, dp), lambda i: (i, 0)),
            ),
            compiler_params=pltpu.CompilerParams(
                dimension_semantics=("parallel",),
                vmem_limit_bytes=_VMEM_LIMIT_BYTES),
        )(xp, sel)
        return out.reshape(orig_shape)

    # General path (D >= 128, or D that can't be packed evenly).
    tr = _pick_tile_rows(rows, d, itemsize, row_align, tile_rows)
    grid = (pl.cdiv(rows, tr),)
    out = pl.pallas_call(
        functools.partial(_ln_rows_kernel, epsilon=epsilon),
        out_shape=jax.ShapeDtypeStruct((rows, d), x.dtype),
        grid_spec=pltpu.PrefetchScalarGridSpec(
            num_scalar_prefetch=0,
            grid=grid,
            in_specs=[pl.BlockSpec((tr, d), lambda i: (i, 0))],
            out_specs=pl.BlockSpec((tr, d), lambda i: (i, 0)),
        ),
        compiler_params=pltpu.CompilerParams(
            dimension_semantics=("parallel",),
            vmem_limit_bytes=_VMEM_LIMIT_BYTES),
    )(x2)
    return out.reshape(orig_shape)


def _reference(x, epsilon):
    mean = jnp.mean(x, axis=-1, keepdims=True)
    var = jnp.mean((x - mean) ** 2, axis=-1, keepdims=True)
    return (x - mean) / jnp.sqrt(var + epsilon)


if __name__ == "__main__":
    key = jax.random.PRNGKey(0)
    k1, k2 = jax.random.split(key)

    # shape consistent with the module: batch=2, seq=8, hidden=32 (lane-packed path)
    x_small = jax.random.normal(k1, (2, 8, 32), dtype=jnp.float32)
    y_small = jax.block_until_ready(ln_v3(x_small, epsilon=1e-5))
    ref_small = _reference(x_small, 1e-5)
    assert jnp.allclose(y_small, ref_small, atol=1e-5, rtol=1e-5), "mismatch (packed path)"

    # larger hidden to exercise the general row-reduction path (multi-step grid, partial tile)
    x_big = jax.random.normal(k2, (5, 8, 256), dtype=jnp.float32)
    y_big = jax.block_until_ready(ln_v3(x_big, epsilon=1e-5))
    ref_big = _reference(x_big, 1e-5)
    assert jnp.allclose(y_big, ref_big, atol=1e-5, rtol=1e-5), "mismatch (general path)"

    print("KERNEL_OK")
</pallas_src>

<mosaic_0001>
module attributes {stable_mosaic.version = 11 : i64} {
  func.func @_ln_packed_kernel(%arg0: i32, %arg1: memref<4x128xf32, #tpu.memory_space<vmem>>, %arg2: memref<128x128xf32, #tpu.memory_space<vmem>>, %arg3: memref<4x128xf32, #tpu.memory_space<vmem>>) attributes {dimension_semantics = [#tpu.dimension_semantics<parallel>], iteration_bounds = array<i64: 1>, scalar_prefetch = 0 : i64, scratch_operands = 0 : i64, tpu.core_type = #tpu.core_type<tc>, window_params = [{transform_indices = @transform_0, window_bounds = array<i64: 4, 128>}, {pipeline_mode = #tpu.pipeline_mode<synchronous>, transform_indices = @transform_1, window_bounds = array<i64: 128, 128>}, {transform_indices = @transform_2, window_bounds = array<i64: 4, 128>}]} {
    %c0 = arith.constant 0 : index
    %c0_0 = arith.constant 0 : index
    %0 = vector.load %arg1[%c0, %c0_0] : memref<4x128xf32, #tpu.memory_space<vmem>>, vector<4x128xf32>
    %c0_1 = arith.constant 0 : index
    %c0_2 = arith.constant 0 : index
    %1 = vector.load %arg2[%c0_1, %c0_2] : memref<128x128xf32, #tpu.memory_space<vmem>>, vector<128x128xf32>
    %cst = arith.constant dense<0.000000e+00> : vector<4x128xf32>
    %2 = tpu.matmul %0, %1, %cst {dimension_numbers = #tpu.dot_dimension_numbers<[1], [0], [0], [1], [0, 0, 1, 1], [], []>, precision = #tpu.contract_precision<fp32>} : vector<4x128xf32>, vector<128x128xf32>, vector<4x128xf32> -> vector<4x128xf32>
    %3 = arith.mulf %0, %0 : vector<4x128xf32>
    %cst_3 = arith.constant dense<0.000000e+00> : vector<4x128xf32>
    %4 = tpu.matmul %3, %1, %cst_3 {dimension_numbers = #tpu.dot_dimension_numbers<[1], [0], [0], [1], [0, 0, 1, 1], [], []>, precision = #tpu.contract_precision<fp32>} : vector<4x128xf32>, vector<128x128xf32>, vector<4x128xf32> -> vector<4x128xf32>
    %5 = arith.mulf %2, %2 : vector<4x128xf32>
    %6 = arith.subf %4, %5 : vector<4x128xf32>
    %cst_4 = arith.constant 0.000000e+00 : f32
    %7 = vector.broadcast %cst_4 : f32 to vector<4x128xf32>
    %8 = arith.maximumf %6, %7 : vector<4x128xf32>
    %cst_5 = arith.constant 9.99999974E-6 : f32
    %9 = vector.broadcast %cst_5 : f32 to vector<4x128xf32>
    %10 = arith.addf %8, %9 : vector<4x128xf32>
    %11 = math.rsqrt %10 : vector<4x128xf32>
    %12 = arith.subf %0, %2 : vector<4x128xf32>
    %13 = arith.mulf %12, %11 : vector<4x128xf32>
    %c0_6 = arith.constant 0 : index
    %c0_7 = arith.constant 0 : index
    %14 = vector.load %arg3[%c0_6, %c0_7] : memref<4x128xf32, #tpu.memory_space<vmem>>, vector<4x128xf32>
    tpu.vector_store %arg3[%c0_6, %c0_7], %13 {strides = array<i32>} : memref<4x128xf32, #tpu.memory_space<vmem>>, vector<4x128xf32>,
    return
  }
  func.func @transform_0(%arg0: i32) -> (i32, i32) {
    %c0_i32 = arith.constant 0 : i32
    %c0_i32_0 = arith.constant 0 : i32
    return %arg0, %c0_i32 : i32, i32
  }
  func.func @transform_1(%arg0: i32) -> (i32, i32) {
    %c0_i32 = arith.constant 0 : i32
    %c0_i32_0 = arith.constant 0 : i32
    %c0_i32_1 = arith.constant 0 : i32
    return %c0_i32, %c0_i32_0 : i32, i32
  }
  func.func @transform_2(%arg0: i32) -> (i32, i32) {
    %c0_i32 = arith.constant 0 : i32
    %c0_i32_0 = arith.constant 0 : i32
    return %arg0, %c0_i32 : i32, i32
  }
}

</mosaic_0001>

<llo_original>
// kernel: tpu_custom_call.1
$region0: #{tpu_custom_call.1}
  #allocation0 [shape = 'u32[]', space=smem, size = 0x4, offset = 0x4, fixed_abs, tag = 'smem constant byte address 0x4 - core index']
  #allocation1 [shape = 'u32[144,128]{1,0:T(1,128)}', space=vmem, size = 0x12000, scoped, tag = 'internal scratch']
  %s0 = inlined_call_operand.hbm [shape: f32[4,128], index: 0, kind: input, shape index: {}]
  %s1 = inlined_call_operand.hbm [shape: f32[128,128], index: 1, kind: input, shape index: {}]
  %s2 = inlined_call_operand.hbm [shape: f32[4,128], index: 2, kind: output, shape index: {}]
  %s3 = sld [smem:[#allocation0]]
  $region26: #{tpu_custom_call.1} parent=0
    _
  %s5 = ssub.s32 1, %s3
  %s6 = scalar_select 0, %s5, %s3
  $region1: #{tpu_custom_call.1} parent=0
    #allocation2 [shape = 'u8[2048]{0}', space=vmem, size = 0x800, scoped, tag = 'input window, operand 0, single buffered']
    #allocation3 [shape = 's32[1]{0}', space=sflag, size = 0x4, scoped, tag = 'scoped memory for tpu_custom_call.1']
    #allocation4 [shape = 's32[1]{0}', space=sflag, size = 0x4, scoped, tag = 'scoped memory for tpu_custom_call.1']
    #allocation5 [shape = 'u8[65536]{0}', space=vmem, size = 0x10000, scoped, tag = 'input window, operand 1, single buffered']
    #allocation6 [shape = 's32[1]{0}', space=sflag, size = 0x4, scoped, tag = 'scoped memory for tpu_custom_call.1']
    #allocation7 [shape = 'u8[2048]{0}', space=vmem, size = 0x800, scoped, tag = 'output window, operand 0, single buffered']
    %7 = vsyncpa [#allocation3], 0
    %8 = vsyncpa [#allocation6], 0
    %9 = vsyncpa [#allocation4], 0
    // Predicated region
    $region2: #{tpu_custom_call.1} parent=1 // pred_check
      _
    $region3: #{tpu_custom_call.1} parent=1 // pred_check_branch
      %11 = sbr.rel (0) target = $region5
    $region4: #{tpu_custom_call.1} parent=1 // pred_region
      %s13 = ssub.s32 64, 64
      %14 = vsyncadd [#allocation3], %s13
      %s16 = sshll.u32 [#allocation2], 4
      %s17 = int_to_ptr.vmem [resolvable:$true] %s16
      %19 = dma.hbm_to_vmem [thread:$0]  %s0, 64, %s17, [#allocation3]
    $region5: #{tpu_custom_call.1} parent=1 // pred_fallthru
      _
    // Predicated region
    $region6: #{tpu_custom_call.1} parent=1 // pred_check
      _
    $region7: #{tpu_custom_call.1} parent=1 // pred_check_branch
      %21 = sbr.rel (0) target = $region9
    $region8: #{tpu_custom_call.1} parent=1 // pred_region
      %s23 = ssub.s32 2048, 2048
      %24 = vsyncadd [#allocation6], %s23
      %s25 = sshll.u32 [#allocation5], 4
      %s26 = int_to_ptr.vmem [resolvable:$true] %s25
      %31 = dma.hbm_to_vmem [thread:$0]  %s1, 2048, %s26, [#allocation6], 128, 128, 8
    $region9: #{tpu_custom_call.1} parent=1 // pred_fallthru
      _
    // Predicated region
    $region10: #{tpu_custom_call.1} parent=1 // pred_check
      _
    $region11: #{tpu_custom_call.1} parent=1 // pred_check_branch
      %33 = sbr.rel (0) target = $region13
    $region12: #{tpu_custom_call.1} parent=1 // pred_region
      %34 = dma.done [#allocation3], 64
    $region13: #{tpu_custom_call.1} parent=1 // pred_fallthru
      _
    // Predicated region
    $region14: #{tpu_custom_call.1} parent=1 // pred_check
      _
    $region15: #{tpu_custom_call.1} parent=1 // pred_check_branch
      %36 = sbr.rel (0) target = $region17
    $region16: #{tpu_custom_call.1} parent=1 // pred_region
      %37 = dma.done [#allocation6], 2048
    $region17: #{tpu_custom_call.1} parent=1 // pred_fallthru
      _
    %v38 = vld [vmem:[#allocation2] sm:$0xf]
    %v39 = vld [vmem:[#allocation5] sm:$0xff]
    %v40 = vld [vmem:[#allocation5 + $0x8] sm:$0xff]
    %v41 = vld [vmem:[#allocation5 + $0x10] sm:$0xff]
    %v42 = vld [vmem:[#allocation5 + $0x18] sm:$0xff]
    %v43 = vld [vmem:[#allocation5 + $0x20] sm:$0xff]
    %v44 = vld [vmem:[#allocation5 + $0x28] sm:$0xff]
    %v45 = vld [vmem:[#allocation5 + $0x30] sm:$0xff]
    %v46 = vld [vmem:[#allocation5 + $0x38] sm:$0xff]
    %v47 = vld [vmem:[#allocation5 + $0x40] sm:$0xff]
    %v48 = vld [vmem:[#allocation5 + $0x48] sm:$0xff]
    %v49 = vld [vmem:[#allocation5 + $0x50] sm:$0xff]
    %v50 = vld [vmem:[#allocation5 + $0x58] sm:$0xff]
    %v51 = vld [vmem:[#allocation5 + $0x60] sm:$0xff]
    %v52 = vld [vmem:[#allocation5 + $0x68] sm:$0xff]
    %v53 = vld [vmem:[#allocation5 + $0x70] sm:$0xff]
    %v54 = vld [vmem:[#allocation5 + $0x78] sm:$0xff]
    %55 = vmatprep.subr.mxu0 0.0
    %v56 = vand.u32 %v39, 4294901760
    %57 = vmatpush1.msra.mxu0 %v56
    %58 = vmatprep.subr.mxu0 0.0
    %v59 = vand.u32 %v40, 4294901760
    %60 = vmatpush1.msra.mxu0 %v59
    %61 = vmatprep.subr.mxu0 0.0
    %v62 = vand.u32 %v41, 4294901760
    %63 = vmatpush1.msra.mxu0 %v62
    %64 = vmatprep.subr.mxu0 0.0
    %v65 = vand.u32 %v42, 4294901760
    %66 = vmatpush1.msra.mxu0 %v65
    %67 = vmatprep.subr.mxu0 0.0
    %v68 = vand.u32 %v43, 4294901760
    %69 = vmatpush1.msra.mxu0 %v68
    %70 = vmatprep.subr.mxu0 0.0
    %v71 = vand.u32 %v44, 4294901760
    %72 = vmatpush1.msra.mxu0 %v71
    %73 = vmatprep.subr.mxu0 0.0
    %v74 = vand.u32 %v45, 4294901760
    %75 = vmatpush1.msra.mxu0 %v74
    %76 = vmatprep.subr.mxu0 0.0
    %v77 = vand.u32 %v46, 4294901760
    %78 = vmatpush1.msra.mxu0 %v77
    %79 = vmatprep.subr.mxu0 0.0
    %v80 = vand.u32 %v47, 4294901760
    %81 = vmatpush1.msra.mxu0 %v80
    %82 = vmatprep.subr.mxu0 0.0
    %v83 = vand.u32 %v48, 4294901760
    %84 = vmatpush1.msra.mxu0 %v83
    %85 = vmatprep.subr.mxu0 0.0
    %v86 = vand.u32 %v49, 4294901760
    %87 = vmatpush1.msra.mxu0 %v86
    %88 = vmatprep.subr.mxu0 0.0
    %v89 = vand.u32 %v50, 4294901760
    %90 = vmatpush1.msra.mxu0 %v89
    %91 = vmatprep.subr.mxu0 0.0
    %v92 = vand.u32 %v51, 4294901760
    %93 = vmatpush1.msra.mxu0 %v92
    %94 = vmatprep.subr.mxu0 0.0
    %v95 = vand.u32 %v52, 4294901760
    %96 = vmatpush1.msra.mxu0 %v95
    %97 = vmatprep.subr.mxu0 0.0
    %v98 = vand.u32 %v53, 4294901760
    %99 = vmatpush1.msra.mxu0 %v98
    %100 = vmatprep.subr.mxu0 0.0
    %v101 = vand.u32 %v54, 4294901760
    %102 = vmatpush1.msra.mxu0 %v101
    %103 = vmatprep.subr.mxu0 0.0
    %104 = vmatpush1.msra.mxu0 0.0
    %105 = vmatprep.subr.mxu0 0.0
    %106 = vmatpush1.msra.mxu0 0.0
    %107 = vmatprep.subr.mxu0 0.0
    %108 = vmatpush1.msra.mxu0 0.0
    %109 = vmatprep.subr.mxu0 0.0
    %110 = vmatpush1.msra.mxu0 0.0
    %111 = vmatprep.subr.mxu0 0.0
    %112 = vmatpush1.msra.mxu0 0.0
    %113 = vmatprep.subr.mxu0 0.0
    %114 = vmatpush1.msra.mxu0 0.0
    %115 = vmatprep.subr.mxu0 0.0
    %116 = vmatpush1.msra.mxu0 0.0
    %117 = vmatprep.subr.mxu0 0.0
    %118 = vmatpush1.msra.mxu0 0.0
    %119 = vmatprep.subr.mxu0 0.0
    %120 = vmatpush1.msra.mxu0 0.0
    %121 = vmatprep.subr.mxu0 0.0
    %122 = vmatpush1.msra.mxu0 0.0
    %123 = vmatprep.subr.mxu0 0.0
    %124 = vmatpush1.msra.mxu0 0.0
    %125 = vmatprep.subr.mxu0 0.0
    %126 = vmatpush1.msra.mxu0 0.0
    %127 = vmatprep.subr.mxu0 0.0
    %128 = vmatpush1.msra.mxu0 0.0
    %129 = vmatprep.subr.mxu0 0.0
    %130 = vmatpush1.msra.mxu0 0.0
    %131 = vmatprep.subr.mxu0 0.0
    %132 = vmatpush1.msra.mxu0 0.0
    %133 = vmatprep.subr.mxu0 0.0
    %134 = vmatpush1.msra.mxu0 0.0
    %135 = vmatprep.mubr.f32.mxu0 0.0
    %v136 = vand.u32 %v38, 4294901760
    %v137 = vsub.f32 %v38, %v136
    %v138 = vand.u32 %v137, 4294901760
    %v139 = vsub.f32 %v137, %v138
    %v140 = vand.u32 %v139, 4294901760
    %141 = vmatmul.mubr.f32.gmra.mrb[0].mxu0 %v140
    %v142 = vpop.f32.mrb[0].mxu0
    %v143 = vadd.f32 0.0, %v142
    %v144 = vpop.f32.mrb[0].mxu0
    %145 = vdwg.mxu0
    %146 = vmatprep.subr.mxu0 0.0
    %v147 = vand.u32 %v39, 4294901760
    %v148 = vsub.f32 %v39, %v147
    %v149 = vand.u32 %v148, 4294901760
    %v150 = vsub.f32 %v148, %v149
    %v151 = vand.u32 %v150, 4294901760
    %152 = vmatpush1.msra.mxu0 %v151
    %153 = vmatprep.subr.mxu0 0.0
    %v154 = vand.u32 %v40, 4294901760
    %v155 = vsub.f32 %v40, %v154
    %v156 = vand.u32 %v155, 4294901760
    %v157 = vsub.f32 %v155, %v156
    %v158 = vand.u32 %v157, 4294901760
    %159 = vmatpush1.msra.mxu0 %v158
    %160 = vmatprep.subr.mxu0 0.0
    %v161 = vand.u32 %v41, 4294901760
    %v162 = vsub.f32 %v41, %v161
    %v163 = vand.u32 %v162, 4294901760
    %v164 = vsub.f32 %v162, %v163
    %v165 = vand.u32 %v164, 4294901760
    %166 = vmatpush1.msra.mxu0 %v165
    %167 = vmatprep.subr.mxu0 0.0
    %v168 = vand.u32 %v42, 4294901760
    %v169 = vsub.f32 %v42, %v168
    %v170 = vand.u32 %v169, 4294901760
    %v171 = vsub.f32 %v169, %v170
    %v172 = vand.u32 %v171, 4294901760
    %173 = vmatpush1.msra.mxu0 %v172
    %174 = vmatprep.subr.mxu0 0.0
    %v175 = vand.u32 %v43, 4294901760
    %v176 = vsub.f32 %v43, %v175
    %v177 = vand.u32 %v176, 4294901760
    %v178 = vsub.f32 %v176, %v177
    %v179 = vand.u32 %v178, 4294901760
    %180 = vmatpush1.msra.mxu0 %v179
    %181 = vmatprep.subr.mxu0 0.0
    %v182 = vand.u32 %v44, 4294901760
    %v183 = vsub.f32 %v44, %v182
    %v184 = vand.u32 %v183, 4294901760
    %v185 = vsub.f32 %v183, %v184
    %v186 = vand.u32 %v185, 4294901760
    %187 = vmatpush1.msra.mxu0 %v186
    %188 = vmatprep.subr.mxu0 0.0
    %v189 = vand.u32 %v45, 4294901760
    %v190 = vsub.f32 %v45, %v189
    %v191 = vand.u32 %v190, 4294901760
    %v192 = vsub.f32 %v190, %v191
    %v193 = vand.u32 %v192, 4294901760
    %194 = vmatpush1.msra.mxu0 %v193
    %195 = vmatprep.subr.mxu0 0.0
    %v196 = vand.u32 %v46, 4294901760
    %v197 = vsub.f32 %v46, %v196
    %v198 = vand.u32 %v197, 4294901760
    %v199 = vsub.f32 %v197, %v198
    %v200 = vand.u32 %v199, 4294901760
    %201 = vmatpush1.msra.mxu0 %v200
    %202 = vmatprep.subr.mxu0 0.0
    %v203 = vand.u32 %v47, 4294901760
    %v204 = vsub.f32 %v47, %v203
    %v205 = vand.u32 %v204, 4294901760
    %v206 = vsub.f32 %v204, %v205
    %v207 = vand.u32 %v206, 4294901760
    %208 = vmatpush1.msra.mxu0 %v207
    %209 = vmatprep.subr.mxu0 0.0
    %v210 = vand.u32 %v48, 4294901760
    %v211 = vsub.f32 %v48, %v210
    %v212 = vand.u32 %v211, 4294901760
    %v213 = vsub.f32 %v211, %v212
    %v214 = vand.u32 %v213, 4294901760
    %215 = vmatpush1.msra.mxu0 %v214
    %216 = vmatprep.subr.mxu0 0.0
    %v217 = vand.u32 %v49, 4294901760
    %v218 = vsub.f32 %v49, %v217
    %v219 = vand.u32 %v218, 4294901760
    %v220 = vsub.f32 %v218, %v219
    %v221 = vand.u32 %v220, 4294901760
    %222 = vmatpush1.msra.mxu0 %v221
    %223 = vmatprep.subr.mxu0 0.0
    %v224 = vand.u32 %v50, 4294901760
    %v225 = vsub.f32 %v50, %v224
    %v226 = vand.u32 %v225, 4294901760
    %v227 = vsub.f32 %v225, %v226
    %v228 = vand.u32 %v227, 4294901760
    %229 = vmatpush1.msra.mxu0 %v228
    %230 = vmatprep.subr.mxu0 0.0
    %v231 = vand.u32 %v51, 4294901760
    %v232 = vsub.f32 %v51, %v231
    %v233 = vand.u32 %v232, 4294901760
    %v234 = vsub.f32 %v232, %v233
    %v235 = vand.u32 %v234, 4294901760
    %236 = vmatpush1.msra.mxu0 %v235
    %237 = vmatprep.subr.mxu0 0.0
    %v238 = vand.u32 %v52, 4294901760
    %v239 = vsub.f32 %v52, %v238
    %v240 = vand.u32 %v239, 4294901760
    %v241 = vsub.f32 %v239, %v240
    %v242 = vand.u32 %v241, 4294901760
    %243 = vmatpush1.msra.mxu0 %v242
    %244 = vmatprep.subr.mxu0 0.0
    %v245 = vand.u32 %v53, 4294901760
    %v246 = vsub.f32 %v53, %v245
    %v247 = vand.u32 %v246, 4294901760
    %v248 = vsub.f32 %v246, %v247
    %v249 = vand.u32 %v248, 4294901760
    %250 = vmatpush1.msra.mxu0 %v249
    %251 = vmatprep.subr.mxu0 0.0
    %v252 = vand.u32 %v54, 4294901760
    %v253 = vsub.f32 %v54, %v252
    %v254 = vand.u32 %v253, 4294901760
    %v255 = vsub.f32 %v253, %v254
    %v256 = vand.u32 %v255, 4294901760
    %257 = vmatpush1.msra.mxu0 %v256
    %258 = vmatprep.subr.mxu0 0.0
    %259 = vmatpush1.msra.mxu0 0.0
    %260 = vmatprep.subr.mxu0 0.0
    %261 = vmatpush1.msra.mxu0 0.0
    %262 = vmatprep.subr.mxu0 0.0
    %263 = vmatpush1.msra.mxu0 0.0
    %264 = vmatprep.subr.mxu0 0.0
    %265 = vmatpush1.msra.mxu0 0.0
    %266 = vmatprep.subr.mxu0 0.0
    %267 = vmatpush1.msra.mxu0 0.0
    %268 = vmatprep.subr.mxu0 0.0
    %269 = vmatpush1.msra.mxu0 0.0
    %270 = vmatprep.subr.mxu0 0.0
    %271 = vmatpush1.msra.mxu0 0.0
    %272 = vmatprep.subr.mxu0 0.0
    %273 = vmatpush1.msra.mxu0 0.0
    %274 = vmatprep.subr.mxu0 0.0
    %275 = vmatpush1.msra.mxu0 0.0
    %276 = vmatprep.subr.mxu0 0.0
    %277 = vmatpush1.msra.mxu0 0.0
    %278 = vmatprep.subr.mxu0 0.0
    %279 = vmatpush1.msra.mxu0 0.0
    %280 = vmatprep.subr.mxu0 0.0
    %281 = vmatpush1.msra.mxu0 0.0
    %282 = vmatprep.subr.mxu0 0.0
    %283 = vmatpush1.msra.mxu0 0.0
    %284 = vmatprep.subr.mxu0 0.0
    %285 = vmatpush1.msra.mxu0 0.0
    %286 = vmatprep.subr.mxu0 0.0
    %287 = vmatpush1.msra.mxu0 0.0
    %288 = vmatprep.subr.mxu0 0.0
    %289 = vmatpush1.msra.mxu0 0.0
    %290 = vmatprep.mubr.f32.mxu0 0.0
    %v291 = vand.u32 %v38, 4294901760
    %292 = vmatmul.mubr.f32.gmra.mrb[0].mxu0 %v291
    %v293 = vpop.f32.mrb[0].mxu0
    %v294 = vadd.f32 %v143, %v293
    %v295 = vpop.f32.mrb[0].mxu0
    %296 = vdwg.mxu0
    %297 = vmatprep.subr.mxu0 0.0
    %v298 = vand.u32 %v39, 4294901760
    %v299 = vsub.f32 %v39, %v298
    %300 = vmatpush1.msra.mxu0 %v299
    %301 = vmatprep.subr.mxu0 0.0
    %v302 = vand.u32 %v40, 4294901760
    %v303 = vsub.f32 %v40, %v302
    %304 = vmatpush1.msra.mxu0 %v303
    %305 = vmatprep.subr.mxu0 0.0
    %v306 = vand.u32 %v41, 4294901760
    %v307 = vsub.f32 %v41, %v306
    %308 = vmatpush1.msra.mxu0 %v307
    %309 = vmatprep.subr.mxu0 0.0
    %v310 = vand.u32 %v42, 4294901760
    %v311 = vsub.f32 %v42, %v310
    %312 = vmatpush1.msra.mxu0 %v311
    %313 = vmatprep.subr.mxu0 0.0
    %v314 = vand.u32 %v43, 4294901760
    %v315 = vsub.f32 %v43, %v314
    %316 = vmatpush1.msra.mxu0 %v315
    %317 = vmatprep.subr.mxu0 0.0
    %v318 = vand.u32 %v44, 4294901760
    %v319 = vsub.f32 %v44, %v318
    %320 = vmatpush1.msra.mxu0 %v319
    %321 = vmatprep.subr.mxu0 0.0
    %v322 = vand.u32 %v45, 4294901760
    %v323 = vsub.f32 %v45, %v322
    %324 = vmatpush1.msra.mxu0 %v323
    %325 = vmatprep.subr.mxu0 0.0
    %v326 = vand.u32 %v46, 4294901760
    %v327 = vsub.f32 %v46, %v326
    %328 = vmatpush1.msra.mxu0 %v327
    %329 = vmatprep.subr.mxu0 0.0
    %v330 = vand.u32 %v47, 4294901760
    %v331 = vsub.f32 %v47, %v330
    %332 = vmatpush1.msra.mxu0 %v331
    %333 = vmatprep.subr.mxu0 0.0
    %v334 = vand.u32 %v48, 4294901760
    %v335 = vsub.f32 %v48, %v334
    %336 = vmatpush1.msra.mxu0 %v335
    %337 = vmatprep.subr.mxu0 0.0
    %v338 = vand.u32 %v49, 4294901760
    %v339 = vsub.f32 %v49, %v338
    %340 = vmatpush1.msra.mxu0 %v339
    %341 = vmatprep.subr.mxu0 0.0
    %v342 = vand.u32 %v50, 4294901760
    %v343 = vsub.f32 %v50, %v342
    %344 = vmatpush1.msra.mxu0 %v343
    %345 = vmatprep.subr.mxu0 0.0
    %v346 = vand.u32 %v51, 4294901760
    %v347 = vsub.f32 %v51, %v346
    %348 = vmatpush1.msra.mxu0 %v347
    %349 = vmatprep.subr.mxu0 0.0
    %v350 = vand.u32 %v52, 4294901760
    %v351 = vsub.f32 %v52, %v350
    %352 = vmatpush1.msra.mxu0 %v351
    %353 = vmatprep.subr.mxu0 0.0
    %v354 = vand.u32 %v53, 4294901760
    %v355 = vsub.f32 %v53, %v354
    %356 = vmatpush1.msra.mxu0 %v355
    %357 = vmatprep.subr.mxu0 0.0
    %v358 = vand.u32 %v54, 4294901760
    %v359 = vsub.f32 %v54, %v358
    %360 = vmatpush1.msra.mxu0 %v359
    %361 = vmatprep.subr.mxu0 0.0
    %362 = vmatpush1.msra.mxu0 0.0
    %363 = vmatprep.subr.mxu0 0.0
    %364 = vmatpush1.msra.mxu0 0.0
    %365 = vmatprep.subr.mxu0 0.0
    %366 = vmatpush1.msra.mxu0 0.0
    %367 = vmatprep.subr.mxu0 0.0
    %368 = vmatpush1.msra.mxu0 0.0
    %369 = vmatprep.subr.mxu0 0.0
    %370 = vmatpush1.msra.mxu0 0.0
    %371 = vmatprep.subr.mxu0 0.0
    %372 = vmatpush1.msra.mxu0 0.0
    %373 = vmatprep.subr.mxu0 0.0
    %374 = vmatpush1.msra.mxu0 0.0
    %375 = vmatprep.subr.mxu0 0.0
    %376 = vmatpush1.msra.mxu0 0.0
    %377 = vmatprep.subr.mxu0 0.0
    %378 = vmatpush1.msra.mxu0 0.0
    %379 = vmatprep.subr.mxu0 0.0
    %380 = vmatpush1.msra.mxu0 0.0
    %381 = vmatprep.subr.mxu0 0.0
    %382 = vmatpush1.msra.mxu0 0.0
    %383 = vmatprep.subr.mxu0 0.0
    %384 = vmatpush1.msra.mxu0 0.0
    %385 = vmatprep.subr.mxu0 0.0
    %386 = vmatpush1.msra.mxu0 0.0
    %387 = vmatprep.subr.mxu0 0.0
    %388 = vmatpush1.msra.mxu0 0.0
    %389 = vmatprep.subr.mxu0 0.0
    %390 = vmatpush1.msra.mxu0 0.0
    %391 = vmatprep.subr.mxu0 0.0
    %392 = vmatpush1.msra.mxu0 0.0
    %393 = vmatprep.mubr.f32.mxu0 0.0
    %v394 = vand.u32 %v38, 4294901760
    %v395 = vsub.f32 %v38, %v394
    %396 = vmatmul.mubr.f32.gmra.mrb[0].mxu0 %v395
    %v397 = vpop.f32.mrb[0].mxu0
    %v398 = vadd.f32 %v294, %v397
    %v399 = vpop.f32.mrb[0].mxu0
    %400 = vdwg.mxu0
    %401 = vmatprep.subr.mxu0 0.0
    %v402 = vand.u32 %v39, 4294901760
    %403 = vmatpush1.msra.mxu0 %v402
    %404 = vmatprep.subr.mxu0 0.0
    %v405 = vand.u32 %v40, 4294901760
    %406 = vmatpush1.msra.mxu0 %v405
    %407 = vmatprep.subr.mxu0 0.0
    %v408 = vand.u32 %v41, 4294901760
    %409 = vmatpush1.msra.mxu0 %v408
    %410 = vmatprep.subr.mxu0 0.0
    %v411 = vand.u32 %v42, 4294901760
    %412 = vmatpush1.msra.mxu0 %v411
    %413 = vmatprep.subr.mxu0 0.0
    %v414 = vand.u32 %v43, 4294901760
    %415 = vmatpush1.msra.mxu0 %v414
    %416 = vmatprep.subr.mxu0 0.0
    %v417 = vand.u32 %v44, 4294901760
    %418 = vmatpush1.msra.mxu0 %v417
    %419 = vmatprep.subr.mxu0 0.0
    %v420 = vand.u32 %v45, 4294901760
    %421 = vmatpush1.msra.mxu0 %v420
    %422 = vmatprep.subr.mxu0 0.0
    %v423 = vand.u32 %v46, 4294901760
    %424 = vmatpush1.msra.mxu0 %v423
    %425 = vmatprep.subr.mxu0 0.0
    %v426 = vand.u32 %v47, 4294901760
    %427 = vmatpush1.msra.mxu0 %v426
    %428 = vmatprep.subr.mxu0 0.0
    %v429 = vand.u32 %v48, 4294901760
    %430 = vmatpush1.msra.mxu0 %v429
    %431 = vmatprep.subr.mxu0 0.0
    %v432 = vand.u32 %v49, 4294901760
    %433 = vmatpush1.msra.mxu0 %v432
    %434 = vmatprep.subr.mxu0 0.0
    %v435 = vand.u32 %v50, 4294901760
    %436 = vmatpush1.msra.mxu0 %v435
    %437 = vmatprep.subr.mxu0 0.0
    %v438 = vand.u32 %v51, 4294901760
    %439 = vmatpush1.msra.mxu0 %v438
    %440 = vmatprep.subr.mxu0 0.0
    %v441 = vand.u32 %v52, 4294901760
    %442 = vmatpush1.msra.mxu0 %v441
    %443 = vmatprep.subr.mxu0 0.0
    %v444 = vand.u32 %v53, 4294901760
    %445 = vmatpush1.msra.mxu0 %v444
    %446 = vmatprep.subr.mxu0 0.0
    %v447 = vand.u32 %v54, 4294901760
    %448 = vmatpush1.msra.mxu0 %v447
    %449 = vmatprep.subr.mxu0 0.0
    %450 = vmatpush1.msra.mxu0 0.0
    %451 = vmatprep.subr.mxu0 0.0
    %452 = vmatpush1.msra.mxu0 0.0
    %453 = vmatprep.subr.mxu0 0.0
    %454 = vmatpush1.msra.mxu0 0.0
    %455 = vmatprep.subr.mxu0 0.0
    %456 = vmatpush1.msra.mxu0 0.0
    %457 = vmatprep.subr.mxu0 0.0
    %458 = vmatpush1.msra.mxu0 0.0
    %459 = vmatprep.subr.mxu0 0.0
    %460 = vmatpush1.msra.mxu0 0.0
    %461 = vmatprep.subr.mxu0 0.0
    %462 = vmatpush1.msra.mxu0 0.0
    %463 = vmatprep.subr.mxu0 0.0
    %464 = vmatpush1.msra.mxu0 0.0
    %465 = vmatprep.subr.mxu0 0.0
    %466 = vmatpush1.msra.mxu0 0.0
    %467 = vmatprep.subr.mxu0 0.0
    %468 = vmatpush1.msra.mxu0 0.0
    %469 = vmatprep.subr.mxu0 0.0
    %470 = vmatpush1.msra.mxu0 0.0
    %471 = vmatprep.subr.mxu0 0.0
    %472 = vmatpush1.msra.mxu0 0.0
    %473 = vmatprep.subr.mxu0 0.0
    %474 = vmatpush1.msra.mxu0 0.0
    %475 = vmatprep.subr.mxu0 0.0
    %476 = vmatpush1.msra.mxu0 0.0
    %477 = vmatprep.subr.mxu0 0.0
    %478 = vmatpush1.msra.mxu0 0.0
    %479 = vmatprep.subr.mxu0 0.0
    %480 = vmatpush1.msra.mxu0 0.0
    %481 = vmatprep.mubr.f32.mxu0 0.0
    %v482 = vand.u32 %v38, 4294901760
    %v483 = vsub.f32 %v38, %v482
    %v484 = vand.u32 %v483, 4294901760
    %485 = vmatmul.mubr.f32.gmra.mrb[0].mxu0 %v484
    %v486 = vpop.f32.mrb[0].mxu0
    %v487 = vadd.f32 %v398, %v486
    %v488 = vpop.f32.mrb[0].mxu0
    %489 = vdwg.mxu0
    %490 = vmatprep.subr.mxu0 0.0
    %v491 = vand.u32 %v39, 4294901760
    %v492 = vsub.f32 %v39, %v491
    %v493 = vand.u32 %v492, 4294901760
    %494 = vmatpush1.msra.mxu0 %v493
    %495 = vmatprep.subr.mxu0 0.0
    %v496 = vand.u32 %v40, 4294901760
    %v497 = vsub.f32 %v40, %v496
    %v498 = vand.u32 %v497, 4294901760
    %499 = vmatpush1.msra.mxu0 %v498
    %500 = vmatprep.subr.mxu0 0.0
    %v501 = vand.u32 %v41, 4294901760
    %v502 = vsub.f32 %v41, %v501
    %v503 = vand.u32 %v502, 4294901760
    %504 = vmatpush1.msra.mxu0 %v503
    %505 = vmatprep.subr.mxu0 0.0
    %v506 = vand.u32 %v42, 4294901760
    %v507 = vsub.f32 %v42, %v506
    %v508 = vand.u32 %v507, 4294901760
    %509 = vmatpush1.msra.mxu0 %v508
    %510 = vmatprep.subr.mxu0 0.0
    %v511 = vand.u32 %v43, 4294901760
    %v512 = vsub.f32 %v43, %v511
    %v513 = vand.u32 %v512, 4294901760
    %514 = vmatpush1.msra.mxu0 %v513
    %515 = vmatprep.subr.mxu0 0.0
    %v516 = vand.u32 %v44, 4294901760
    %v517 = vsub.f32 %v44, %v516
    %v518 = vand.u32 %v517, 4294901760
    %519 = vmatpush1.msra.mxu0 %v518
    %520 = vmatprep.subr.mxu0 0.0
    %v521 = vand.u32 %v45, 4294901760
    %v522 = vsub.f32 %v45, %v521
    %v523 = vand.u32 %v522, 4294901760
    %524 = vmatpush1.msra.mxu0 %v523
    %525 = vmatprep.subr.mxu0 0.0
    %v526 = vand.u32 %v46, 4294901760
    %v527 = vsub.f32 %v46, %v526
    %v528 = vand.u32 %v527, 4294901760
    %529 = vmatpush1.msra.mxu0 %v528
    %530 = vmatprep.subr.mxu0 0.0
    %v531 = vand.u32 %v47, 4294901760
    %v532 = vsub.f32 %v47, %v531
    %v533 = vand.u32 %v532, 4294901760
    %534 = vmatpush1.msra.mxu0 %v533
    %535 = vmatprep.subr.mxu0 0.0
    %v536 = vand.u32 %v48, 4294901760
    %v537 = vsub.f32 %v48, %v536
    %v538 = vand.u32 %v537, 4294901760
    %539 = vmatpush1.msra.mxu0 %v538
    %540 = vmatprep.subr.mxu0 0.0
    %v541 = vand.u32 %v49, 4294901760
    %v542 = vsub.f32 %v49, %v541
    %v543 = vand.u32 %v542, 4294901760
    %544 = vmatpush1.msra.mxu0 %v543
    %545 = vmatprep.subr.mxu0 0.0
    %v546 = vand.u32 %v50, 4294901760
    %v547 = vsub.f32 %v50, %v546
    %v548 = vand.u32 %v547, 4294901760
    %549 = vmatpush1.msra.mxu0 %v548
    %550 = vmatprep.subr.mxu0 0.0
    %v551 = vand.u32 %v51, 4294901760
    %v552 = vsub.f32 %v51, %v551
    %v553 = vand.u32 %v552, 4294901760
    %554 = vmatpush1.msra.mxu0 %v553
    %555 = vmatprep.subr.mxu0 0.0
    %v556 = vand.u32 %v52, 4294901760
    %v557 = vsub.f32 %v52, %v556
    %v558 = vand.u32 %v557, 4294901760
    %559 = vmatpush1.msra.mxu0 %v558
    %560 = vmatprep.subr.mxu0 0.0
    %v561 = vand.u32 %v53, 4294901760
    %v562 = vsub.f32 %v53, %v561
    %v563 = vand.u32 %v562, 4294901760
    %564 = vmatpush1.msra.mxu0 %v563
    %565 = vmatprep.subr.mxu0 0.0
    %v566 = vand.u32 %v54, 4294901760
    %v567 = vsub.f32 %v54, %v566
    %v568 = vand.u32 %v567, 4294901760
    %569 = vmatpush1.msra.mxu0 %v568
    %570 = vmatprep.subr.mxu0 0.0
    %571 = vmatpush1.msra.mxu0 0.0
    %572 = vmatprep.subr.mxu0 0.0
    %573 = vmatpush1.msra.mxu0 0.0
    %574 = vmatprep.subr.mxu0 0.0
    %575 = vmatpush1.msra.mxu0 0.0
    %576 = vmatprep.subr.mxu0 0.0
    %577 = vmatpush1.msra.mxu0 0.0
    %578 = vmatprep.subr.mxu0 0.0
    %579 = vmatpush1.msra.mxu0 0.0
    %580 = vmatprep.subr.mxu0 0.0
    %581 = vmatpush1.msra.mxu0 0.0
    %582 = vmatprep.subr.mxu0 0.0
    %583 = vmatpush1.msra.mxu0 0.0
    %584 = vmatprep.subr.mxu0 0.0
    %585 = vmatpush1.msra.mxu0 0.0
    %586 = vmatprep.subr.mxu0 0.0
    %587 = vmatpush1.msra.mxu0 0.0
    %588 = vmatprep.subr.mxu0 0.0
    %589 = vmatpush1.msra.mxu0 0.0
    %590 = vmatprep.subr.mxu0 0.0
    %591 = vmatpush1.msra.mxu0 0.0
    %592 = vmatprep.subr.mxu0 0.0
    %593 = vmatpush1.msra.mxu0 0.0
    %594 = vmatprep.subr.mxu0 0.0
    %595 = vmatpush1.msra.mxu0 0.0
    %596 = vmatprep.subr.mxu0 0.0
    %597 = vmatpush1.msra.mxu0 0.0
    %598 = vmatprep.subr.mxu0 0.0
    %599 = vmatpush1.msra.mxu0 0.0
    %600 = vmatprep.subr.mxu0 0.0
    %601 = vmatpush1.msra.mxu0 0.0
    %602 = vmatprep.mubr.f32.mxu0 0.0
    %v603 = vand.u32 %v38, 4294901760
    %604 = vmatmul.mubr.f32.gmra.mrb[0].mxu0 %v603
    %v605 = vpop.f32.mrb[0].mxu0
    %v606 = vadd.f32 %v487, %v605
    %v607 = vpop.f32.mrb[0].mxu0
    %608 = vdwg.mxu0
    %609 = vmatprep.subr.mxu0 0.0
    %v610 = vand.u32 %v39, 4294901760
    %611 = vmatpush1.msra.mxu0 %v610
    %612 = vmatprep.subr.mxu0 0.0
    %v613 = vand.u32 %v40, 4294901760
    %614 = vmatpush1.msra.mxu0 %v613
    %615 = vmatprep.subr.mxu0 0.0
    %v616 = vand.u32 %v41, 4294901760
    %617 = vmatpush1.msra.mxu0 %v616
    %618 = vmatprep.subr.mxu0 0.0
    %v619 = vand.u32 %v42, 4294901760
    %620 = vmatpush1.msra.mxu0 %v619
    %621 = vmatprep.subr.mxu0 0.0
    %v622 = vand.u32 %v43, 4294901760
    %623 = vmatpush1.msra.mxu0 %v622
    %624 = vmatprep.subr.mxu0 0.0
    %v625 = vand.u32 %v44, 4294901760
    %626 = vmatpush1.msra.mxu0 %v625
    %627 = vmatprep.subr.mxu0 0.0
    %v628 = vand.u32 %v45, 4294901760
    %629 = vmatpush1.msra.mxu0 %v628
    %630 = vmatprep.subr.mxu0 0.0
    %v631 = vand.u32 %v46, 4294901760
    %632 = vmatpush1.msra.mxu0 %v631
    %633 = vmatprep.subr.mxu0 0.0
    %v634 = vand.u32 %v47, 4294901760
    %635 = vmatpush1.msra.mxu0 %v634
    %636 = vmatprep.subr.mxu0 0.0
    %v637 = vand.u32 %v48, 4294901760
    %638 = vmatpush1.msra.mxu0 %v637
    %639 = vmatprep.subr.mxu0 0.0
    %v640 = vand.u32 %v49, 4294901760
    %641 = vmatpush1.msra.mxu0 %v640
    %642 = vmatprep.subr.mxu0 0.0
    %v643 = vand.u32 %v50, 4294901760
    %644 = vmatpush1.msra.mxu0 %v643
    %645 = vmatprep.subr.mxu0 0.0
    %v646 = vand.u32 %v51, 4294901760
    %647 = vmatpush1.msra.mxu0 %v646
    %648 = vmatprep.subr.mxu0 0.0
    %v649 = vand.u32 %v52, 4294901760
    %650 = vmatpush1.msra.mxu0 %v649
    %651 = vmatprep.subr.mxu0 0.0
    %v652 = vand.u32 %v53, 4294901760
    %653 = vmatpush1.msra.mxu0 %v652
    %654 = vmatprep.subr.mxu0 0.0
    %v655 = vand.u32 %v54, 4294901760
    %656 = vmatpush1.msra.mxu0 %v655
    %657 = vmatprep.subr.mxu0 0.0
    %658 = vmatpush1.msra.mxu0 0.0
    %659 = vmatprep.subr.mxu0 0.0
    %660 = vmatpush1.msra.mxu0 0.0
    %661 = vmatprep.subr.mxu0 0.0
    %662 = vmatpush1.msra.mxu0 0.0
    %663 = vmatprep.subr.mxu0 0.0
    %664 = vmatpush1.msra.mxu0 0.0
    %665 = vmatprep.subr.mxu0 0.0
    %666 = vmatpush1.msra.mxu0 0.0
    %667 = vmatprep.subr.mxu0 0.0
    %668 = vmatpush1.msra.mxu0 0.0
    %669 = vmatprep.subr.mxu0 0.0
    %670 = vmatpush1.msra.mxu0 0.0
    %671 = vmatprep.subr.mxu0 0.0
    %672 = vmatpush1.msra.mxu0 0.0
    %673 = vmatprep.subr.mxu0 0.0
    %674 = vmatpush1.msra.mxu0 0.0
    %675 = vmatprep.subr.mxu0 0.0
    %676 = vmatpush1.msra.mxu0 0.0
    %677 = vmatprep.subr.mxu0 0.0
    %678 = vmatpush1.msra.mxu0 0.0
    %679 = vmatprep.subr.mxu0 0.0
    %680 = vmatpush1.msra.mxu0 0.0
    %681 = vmatprep.subr.mxu0 0.0
    %682 = vmatpush1.msra.mxu0 0.0
    %683 = vmatprep.subr.mxu0 0.0
    %684 = vmatpush1.msra.mxu0 0.0
    %685 = vmatprep.subr.mxu0 0.0
    %686 = vmatpush1.msra.mxu0 0.0
    %687 = vmatprep.subr.mxu0 0.0
    %688 = vmatpush1.msra.mxu0 0.0
    %689 = vmatprep.mubr.f32.mxu0 0.0
    %v690 = vand.u32 %v38, 4294901760
    %691 = vmatmul.mubr.f32.gmra.mrb[0].mxu0 %v690
    %v692 = vpop.f32.mrb[0].mxu0
    %v693 = vadd.f32 %v606, %v692
    %v694 = vpop.f32.mrb[0].mxu0
    %695 = vdwg.mxu0
    %v696 = vmul.f32 %v38, %v38
    %697 = vmatprep.subr.mxu0 0.0
    %v698 = vand.u32 %v39, 4294901760
    %699 = vmatpush1.msra.mxu0 %v698
    %700 = vmatprep.subr.mxu0 0.0
    %v701 = vand.u32 %v40, 4294901760
    %702 = vmatpush1.msra.mxu0 %v701
    %703 = vmatprep.subr.mxu0 0.0
    %v704 = vand.u32 %v41, 4294901760
    %705 = vmatpush1.msra.mxu0 %v704
    %706 = vmatprep.subr.mxu0 0.0
    %v707 = vand.u32 %v42, 4294901760
    %708 = vmatpush1.msra.mxu0 %v707
    %709 = vmatprep.subr.mxu0 0.0
    %v710 = vand.u32 %v43, 4294901760
    %711 = vmatpush1.msra.mxu0 %v710
    %712 = vmatprep.subr.mxu0 0.0
    %v713 = vand.u32 %v44, 4294901760
    %714 = vmatpush1.msra.mxu0 %v713
    %715 = vmatprep.subr.mxu0 0.0
    %v716 = vand.u32 %v45, 4294901760
    %717 = vmatpush1.msra.mxu0 %v716
    %718 = vmatprep.subr.mxu0 0.0
    %v719 = vand.u32 %v46, 4294901760
    %720 = vmatpush1.msra.mxu0 %v719
    %721 = vmatprep.subr.mxu0 0.0
    %v722 = vand.u32 %v47, 4294901760
    %723 = vmatpush1.msra.mxu0 %v722
    %724 = vmatprep.subr.mxu0 0.0
    %v725 = vand.u32 %v48, 4294901760
    %726 = vmatpush1.msra.mxu0 %v725
    %727 = vmatprep.subr.mxu0 0.0
    %v728 = vand.u32 %v49, 4294901760
    %729 = vmatpush1.msra.mxu0 %v728
    %730 = vmatprep.subr.mxu0 0.0
    %v731 = vand.u32 %v50, 4294901760
    %732 = vmatpush1.msra.mxu0 %v731
    %733 = vmatprep.subr.mxu0 0.0
    %v734 = vand.u32 %v51, 4294901760
    %735 = vmatpush1.msra.mxu0 %v734
    %736 = vmatprep.subr.mxu0 0.0
    %v737 = vand.u32 %v52, 4294901760
    %738 = vmatpush1.msra.mxu0 %v737
    %739 = vmatprep.subr.mxu0 0.0
    %v740 = vand.u32 %v53, 4294901760
    %741 = vmatpush1.msra.mxu0 %v740
    %742 = vmatprep.subr.mxu0 0.0
    %v743 = vand.u32 %v54, 4294901760
    %744 = vmatpush1.msra.mxu0 %v743
    %745 = vmatprep.subr.mxu0 0.0
    %746 = vmatpush1.msra.mxu0 0.0
    %747 = vmatprep.subr.mxu0 0.0
    %748 = vmatpush1.msra.mxu0 0.0
    %749 = vmatprep.subr.mxu0 0.0
    %750 = vmatpush1.msra.mxu0 0.0
    %751 = vmatprep.subr.mxu0 0.0
    %752 = vmatpush1.msra.mxu0 0.0
    %753 = vmatprep.subr.mxu0 0.0
    %754 = vmatpush1.msra.mxu0 0.0
    %755 = vmatprep.subr.mxu0 0.0
    %756 = vmatpush1.msra.mxu0 0.0
    %757 = vmatprep.subr.mxu0 0.0
    %758 = vmatpush1.msra.mxu0 0.0
    %759 = vmatprep.subr.mxu0 0.0
    %760 = vmatpush1.msra.mxu0 0.0
    %761 = vmatprep.subr.mxu0 0.0
    %762 = vmatpush1.msra.mxu0 0.0
    %763 = vmatprep.subr.mxu0 0.0
    %764 = vmatpush1.msra.mxu0 0.0
    %765 = vmatprep.subr.mxu0 0.0
    %766 = vmatpush1.msra.mxu0 0.0
    %767 = vmatprep.subr.mxu0 0.0
    %768 = vmatpush1.msra.mxu0 0.0
    %769 = vmatprep.subr.mxu0 0.0
    %770 = vmatpush1.msra.mxu0 0.0
    %771 = vmatprep.subr.mxu0 0.0
    %772 = vmatpush1.msra.mxu0 0.0
    %773 = vmatprep.subr.mxu0 0.0
    %774 = vmatpush1.msra.mxu0 0.0
    %775 = vmatprep.subr.mxu0 0.0
    %776 = vmatpush1.msra.mxu0 0.0
    %777 = vmatprep.mubr.f32.mxu0 0.0
    %v778 = vand.u32 %v696, 4294901760
    %v779 = vsub.f32 %v696, %v778
    %v780 = vand.u32 %v779, 4294901760
    %v781 = vsub.f32 %v779, %v780
    %v782 = vand.u32 %v781, 4294901760
    %783 = vmatmul.mubr.f32.gmra.mrb[0].mxu0 %v782
    %v784 = vpop.f32.mrb[0].mxu0
    %v785 = vadd.f32 0.0, %v784
    %v786 = vpop.f32.mrb[0].mxu0
    %787 = vdwg.mxu0
    %788 = vmatprep.subr.mxu0 0.0
    %v789 = vand.u32 %v39, 4294901760
    %v790 = vsub.f32 %v39, %v789
    %v791 = vand.u32 %v790, 4294901760
    %v792 = vsub.f32 %v790, %v791
    %v793 = vand.u32 %v792, 4294901760
    %794 = vmatpush1.msra.mxu0 %v793
    %795 = vmatprep.subr.mxu0 0.0
    %v796 = vand.u32 %v40, 4294901760
    %v797 = vsub.f32 %v40, %v796
    %v798 = vand.u32 %v797, 4294901760
    %v799 = vsub.f32 %v797, %v798
    %v800 = vand.u32 %v799, 4294901760
    %801 = vmatpush1.msra.mxu0 %v800
    %802 = vmatprep.subr.mxu0 0.0
    %v803 = vand.u32 %v41, 4294901760
    %v804 = vsub.f32 %v41, %v803
    %v805 = vand.u32 %v804, 4294901760
    %v806 = vsub.f32 %v804, %v805
    %v807 = vand.u32 %v806, 4294901760
    %808 = vmatpush1.msra.mxu0 %v807
    %809 = vmatprep.subr.mxu0 0.0
    %v810 = vand.u32 %v42, 4294901760
    %v811 = vsub.f32 %v42, %v810
    %v812 = vand.u32 %v811, 4294901760
    %v813 = vsub.f32 %v811, %v812
    %v814 = vand.u32 %v813, 4294901760
    %815 = vmatpush1.msra.mxu0 %v814
    %816 = vmatprep.subr.mxu0 0.0
    %v817 = vand.u32 %v43, 4294901760
    %v818 = vsub.f32 %v43, %v817
    %v819 = vand.u32 %v818, 4294901760
    %v820 = vsub.f32 %v818, %v819
    %v821 = vand.u32 %v820, 4294901760
    %822 = vmatpush1.msra.mxu0 %v821
    %823 = vmatprep.subr.mxu0 0.0
    %v824 = vand.u32 %v44, 4294901760
    %v825 = vsub.f32 %v44, %v824
    %v826 = vand.u32 %v825, 4294901760
    %v827 = vsub.f32 %v825, %v826
    %v828 = vand.u32 %v827, 4294901760
    %829 = vmatpush1.msra.mxu0 %v828
    %830 = vmatprep.subr.mxu0 0.0
    %v831 = vand.u32 %v45, 4294901760
    %v832 = vsub.f32 %v45, %v831
    %v833 = vand.u32 %v832, 4294901760
    %v834 = vsub.f32 %v832, %v833
    %v835 = vand.u32 %v834, 4294901760
    %836 = vmatpush1.msra.mxu0 %v835
    %837 = vmatprep.subr.mxu0 0.0
    %v838 = vand.u32 %v46, 4294901760
    %v839 = vsub.f32 %v46, %v838
    %v840 = vand.u32 %v839, 4294901760
    %v841 = vsub.f32 %v839, %v840
    %v842 = vand.u32 %v841, 4294901760
    %843 = vmatpush1.msra.mxu0 %v842
    %844 = vmatprep.subr.mxu0 0.0
    %v845 = vand.u32 %v47, 4294901760
    %v846 = vsub.f32 %v47, %v845
    %v847 = vand.u32 %v846, 4294901760
    %v848 = vsub.f32 %v846, %v847
    %v849 = vand.u32 %v848, 4294901760
    %850 = vmatpush1.msra.mxu0 %v849
    %851 = vmatprep.subr.mxu0 0.0
    %v852 = vand.u32 %v48, 4294901760
    %v853 = vsub.f32 %v48, %v852
    %v854 = vand.u32 %v853, 4294901760
    %v855 = vsub.f32 %v853, %v854
    %v856 = vand.u32 %v855, 4294901760
    %857 = vmatpush1.msra.mxu0 %v856
    %858 = vmatprep.subr.mxu0 0.0
    %v859 = vand.u32 %v49, 4294901760
    %v860 = vsub.f32 %v49, %v859
    %v861 = vand.u32 %v860, 4294901760
    %v862 = vsub.f32 %v860, %v861
    %v863 = vand.u32 %v862, 4294901760
    %864 = vmatpush1.msra.mxu0 %v863
    %865 = vmatprep.subr.mxu0 0.0
    %v866 = vand.u32 %v50, 4294901760
    %v867 = vsub.f32 %v50, %v866
    %v868 = vand.u32 %v867, 4294901760
    %v869 = vsub.f32 %v867, %v868
    %v870 = vand.u32 %v869, 4294901760
    %871 = vmatpush1.msra.mxu0 %v870
    %872 = vmatprep.subr.mxu0 0.0
    %v873 = vand.u32 %v51, 4294901760
    %v874 = vsub.f32 %v51, %v873
    %v875 = vand.u32 %v874, 4294901760
    %v876 = vsub.f32 %v874, %v875
    %v877 = vand.u32 %v876, 4294901760
    %878 = vmatpush1.msra.mxu0 %v877
    %879 = vmatprep.subr.mxu0 0.0
    %v880 = vand.u32 %v52, 4294901760
    %v881 = vsub.f32 %v52, %v880
    %v882 = vand.u32 %v881, 4294901760
    %v883 = vsub.f32 %v881, %v882
    %v884 = vand.u32 %v883, 4294901760
    %885 = vmatpush1.msra.mxu0 %v884
    %886 = vmatprep.subr.mxu0 0.0
    %v887 = vand.u32 %v53, 4294901760
    %v888 = vsub.f32 %v53, %v887
    %v889 = vand.u32 %v888, 4294901760
    %v890 = vsub.f32 %v888, %v889
    %v891 = vand.u32 %v890, 4294901760
    %892 = vmatpush1.msra.mxu0 %v891
    %893 = vmatprep.subr.mxu0 0.0
    %v894 = vand.u32 %v54, 4294901760
    %v895 = vsub.f32 %v54, %v894
    %v896 = vand.u32 %v895, 4294901760
    %v897 = vsub.f32 %v895, %v896
    %v898 = vand.u32 %v897, 4294901760
    %899 = vmatpush1.msra.mxu0 %v898
    %900 = vmatprep.subr.mxu0 0.0
    %901 = vmatpush1.msra.mxu0 0.0
    %902 = vmatprep.subr.mxu0 0.0
    %903 = vmatpush1.msra.mxu0 0.0
    %904 = vmatprep.subr.mxu0 0.0
    %905 = vmatpush1.msra.mxu0 0.0
    %906 = vmatprep.subr.mxu0 0.0
    %907 = vmatpush1.msra.mxu0 0.0
    %908 = vmatprep.subr.mxu0 0.0
    %909 = vmatpush1.msra.mxu0 0.0
    %910 = vmatprep.subr.mxu0 0.0
    %911 = vmatpush1.msra.mxu0 0.0
    %912 = vmatprep.subr.mxu0 0.0
    %913 = vmatpush1.msra.mxu0 0.0
    %914 = vmatprep.subr.mxu0 0.0
    %915 = vmatpush1.msra.mxu0 0.0
    %916 = vmatprep.subr.mxu0 0.0
    %917 = vmatpush1.msra.mxu0 0.0
    %918 = vmatprep.subr.mxu0 0.0
    %919 = vmatpush1.msra.mxu0 0.0
    %920 = vmatprep.subr.mxu0 0.0
    %921 = vmatpush1.msra.mxu0 0.0
    %922 = vmatprep.subr.mxu0 0.0
    %923 = vmatpush1.msra.mxu0 0.0
    %924 = vmatprep.subr.mxu0 0.0
    %925 = vmatpush1.msra.mxu0 0.0
    %926 = vmatprep.subr.mxu0 0.0
    %927 = vmatpush1.msra.mxu0 0.0
    %928 = vmatprep.subr.mxu0 0.0
    %929 = vmatpush1.msra.mxu0 0.0
    %930 = vmatprep.subr.mxu0 0.0
    %931 = vmatpush1.msra.mxu0 0.0
    %932 = vmatprep.mubr.f32.mxu0 0.0
    %v933 = vand.u32 %v696, 4294901760
    %934 = vmatmul.mubr.f32.gmra.mrb[0].mxu0 %v933
    %v935 = vpop.f32.mrb[0].mxu0
    %v936 = vadd.f32 %v785, %v935
    %v937 = vpop.f32.mrb[0].mxu0
    %938 = vdwg.mxu0
    %939 = vmatprep.subr.mxu0 0.0
    %v940 = vand.u32 %v39, 4294901760
    %v941 = vsub.f32 %v39, %v940
    %942 = vmatpush1.msra.mxu0 %v941
    %943 = vmatprep.subr.mxu0 0.0
    %v944 = vand.u32 %v40, 4294901760
    %v945 = vsub.f32 %v40, %v944
    %946 = vmatpush1.msra.mxu0 %v945
    %947 = vmatprep.subr.mxu0 0.0
    %v948 = vand.u32 %v41, 4294901760
    %v949 = vsub.f32 %v41, %v948
    %950 = vmatpush1.msra.mxu0 %v949
    %951 = vmatprep.subr.mxu0 0.0
    %v952 = vand.u32 %v42, 4294901760
    %v953 = vsub.f32 %v42, %v952
    %954 = vmatpush1.msra.mxu0 %v953
    %955 = vmatprep.subr.mxu0 0.0
    %v956 = vand.u32 %v43, 4294901760
    %v957 = vsub.f32 %v43, %v956
    %958 = vmatpush1.msra.mxu0 %v957
    %959 = vmatprep.subr.mxu0 0.0
    %v960 = vand.u32 %v44, 4294901760
    %v961 = vsub.f32 %v44, %v960
    %962 = vmatpush1.msra.mxu0 %v961
    %963 = vmatprep.subr.mxu0 0.0
    %v964 = vand.u32 %v45, 4294901760
    %v965 = vsub.f32 %v45, %v964
    %966 = vmatpush1.msra.mxu0 %v965
    %967 = vmatprep.subr.mxu0 0.0
    %v968 = vand.u32 %v46, 4294901760
    %v969 = vsub.f32 %v46, %v968
    %970 = vmatpush1.msra.mxu0 %v969
    %971 = vmatprep.subr.mxu0 0.0
    %v972 = vand.u32 %v47, 4294901760
    %v973 = vsub.f32 %v47, %v972
    %974 = vmatpush1.msra.mxu0 %v973
    %975 = vmatprep.subr.mxu0 0.0
    %v976 = vand.u32 %v48, 4294901760
    %v977 = vsub.f32 %v48, %v976
    %978 = vmatpush1.msra.mxu0 %v977
    %979 = vmatprep.subr.mxu0 0.0
    %v980 = vand.u32 %v49, 4294901760
    %v981 = vsub.f32 %v49, %v980
    %982 = vmatpush1.msra.mxu0 %v981
    %983 = vmatprep.subr.mxu0 0.0
    %v984 = vand.u32 %v50, 4294901760
    %v985 = vsub.f32 %v50, %v984
    %986 = vmatpush1.msra.mxu0 %v985
    %987 = vmatprep.subr.mxu0 0.0
    %v988 = vand.u32 %v51, 4294901760
    %v989 = vsub.f32 %v51, %v988
    %990 = vmatpush1.msra.mxu0 %v989
    %991 = vmatprep.subr.mxu0 0.0
    %v992 = vand.u32 %v52, 4294901760
    %v993 = vsub.f32 %v52, %v992
    %994 = vmatpush1.msra.mxu0 %v993
    %995 = vmatprep.subr.mxu0 0.0
    %v996 = vand.u32 %v53, 4294901760
    %v997 = vsub.f32 %v53, %v996
    %998 = vmatpush1.msra.mxu0 %v997
    %999 = vmatprep.subr.mxu0 0.0
    %v1000 = vand.u32 %v54, 4294901760
    %v1001 = vsub.f32 %v54, %v1000
    %1002 = vmatpush1.msra.mxu0 %v1001
    %1003 = vmatprep.subr.mxu0 0.0
    %1004 = vmatpush1.msra.mxu0 0.0
    %1005 = vmatprep.subr.mxu0 0.0
    %1006 = vmatpush1.msra.mxu0 0.0
    %1007 = vmatprep.subr.mxu0 0.0
    %1008 = vmatpush1.msra.mxu0 0.0
    %1009 = vmatprep.subr.mxu0 0.0
    %1010 = vmatpush1.msra.mxu0 0.0
    %1011 = vmatprep.subr.mxu0 0.0
    %1012 = vmatpush1.msra.mxu0 0.0
    %1013 = vmatprep.subr.mxu0 0.0
    %1014 = vmatpush1.msra.mxu0 0.0
    %1015 = vmatprep.subr.mxu0 0.0
    %1016 = vmatpush1.msra.mxu0 0.0
    %1017 = vmatprep.subr.mxu0 0.0
    %1018 = vmatpush1.msra.mxu0 0.0
    %1019 = vmatprep.subr.mxu0 0.0
    %1020 = vmatpush1.msra.mxu0 0.0
    %1021 = vmatprep.subr.mxu0 0.0
    %1022 = vmatpush1.msra.mxu0 0.0
    %1023 = vmatprep.subr.mxu0 0.0
    %1024 = vmatpush1.msra.mxu0 0.0
    %1025 = vmatprep.subr.mxu0 0.0
    %1026 = vmatpush1.msra.mxu0 0.0
    %1027 = vmatprep.subr.mxu0 0.0
    %1028 = vmatpush1.msra.mxu0 0.0
    %1029 = vmatprep.subr.mxu0 0.0
    %1030 = vmatpush1.msra.mxu0 0.0
    %1031 = vmatprep.subr.mxu0 0.0
    %1032 = vmatpush1.msra.mxu0 0.0
    %1033 = vmatprep.subr.mxu0 0.0
    %1034 = vmatpush1.msra.mxu0 0.0
    %1035 = vmatprep.mubr.f32.mxu0 0.0
    %v1036 = vand.u32 %v696, 4294901760
    %v1037 = vsub.f32 %v696, %v1036
    %1038 = vmatmul.mubr.f32.gmra.mrb[0].mxu0 %v1037
    %v1039 = vpop.f32.mrb[0].mxu0
    %v1040 = vadd.f32 %v936, %v1039
    %v1041 = vpop.f32.mrb[0].mxu0
    %1042 = vdwg.mxu0
    %1043 = vmatprep.subr.mxu0 0.0
    %v1044 = vand.u32 %v39, 4294901760
    %1045 = vmatpush1.msra.mxu0 %v1044
    %1046 = vmatprep.subr.mxu0 0.0
    %v1047 = vand.u32 %v40, 4294901760
    %1048 = vmatpush1.msra.mxu0 %v1047
    %1049 = vmatprep.subr.mxu0 0.0
    %v1050 = vand.u32 %v41, 4294901760
    %1051 = vmatpush1.msra.mxu0 %v1050
    %1052 = vmatprep.subr.mxu0 0.0
    %v1053 = vand.u32 %v42, 4294901760
    %1054 = vmatpush1.msra.mxu0 %v1053
    %1055 = vmatprep.subr.mxu0 0.0
    %v1056 = vand.u32 %v43, 4294901760
    %1057 = vmatpush1.msra.mxu0 %v1056
    %1058 = vmatprep.subr.mxu0 0.0
    %v1059 = vand.u32 %v44, 4294901760
    %1060 = vmatpush1.msra.mxu0 %v1059
    %1061 = vmatprep.subr.mxu0 0.0
    %v1062 = vand.u32 %v45, 4294901760
    %1063 = vmatpush1.msra.mxu0 %v1062
    %1064 = vmatprep.subr.mxu0 0.0
    %v1065 = vand.u32 %v46, 4294901760
    %1066 = vmatpush1.msra.mxu0 %v1065
    %1067 = vmatprep.subr.mxu0 0.0
    %v1068 = vand.u32 %v47, 4294901760
    %1069 = vmatpush1.msra.mxu0 %v1068
    %1070 = vmatprep.subr.mxu0 0.0
    %v1071 = vand.u32 %v48, 4294901760
    %1072 = vmatpush1.msra.mxu0 %v1071
    %1073 = vmatprep.subr.mxu0 0.0
    %v1074 = vand.u32 %v49, 4294901760
    %1075 = vmatpush1.msra.mxu0 %v1074
    %1076 = vmatprep.subr.mxu0 0.0
    %v1077 = vand.u32 %v50, 4294901760
    %1078 = vmatpush1.msra.mxu0 %v1077
    %1079 = vmatprep.subr.mxu0 0.0
    %v1080 = vand.u32 %v51, 4294901760
    %1081 = vmatpush1.msra.mxu0 %v1080
    %1082 = vmatprep.subr.mxu0 0.0
    %v1083 = vand.u32 %v52, 4294901760
    %1084 = vmatpush1.msra.mxu0 %v1083
    %1085 = vmatprep.subr.mxu0 0.0
    %v1086 = vand.u32 %v53, 4294901760
    %1087 = vmatpush1.msra.mxu0 %v1086
    %1088 = vmatprep.subr.mxu0 0.0
    %v1089 = vand.u32 %v54, 4294901760
    %1090 = vmatpush1.msra.mxu0 %v1089
    %1091 = vmatprep.subr.mxu0 0.0
    %1092 = vmatpush1.msra.mxu0 0.0
    %1093 = vmatprep.subr.mxu0 0.0
    %1094 = vmatpush1.msra.mxu0 0.0
    %1095 = vmatprep.subr.mxu0 0.0
    %1096 = vmatpush1.msra.mxu0 0.0
    %1097 = vmatprep.subr.mxu0 0.0
    %1098 = vmatpush1.msra.mxu0 0.0
    %1099 = vmatprep.subr.mxu0 0.0
    %1100 = vmatpush1.msra.mxu0 0.0
    %1101 = vmatprep.subr.mxu0 0.0
    %1102 = vmatpush1.msra.mxu0 0.0
    %1103 = vmatprep.subr.mxu0 0.0
    %1104 = vmatpush1.msra.mxu0 0.0
    %1105 = vmatprep.subr.mxu0 0.0
    %1106 = vmatpush1.msra.mxu0 0.0
    %1107 = vmatprep.subr.mxu0 0.0
    %1108 = vmatpush1.msra.mxu0 0.0
    %1109 = vmatprep.subr.mxu0 0.0
    %1110 = vmatpush1.msra.mxu0 0.0
    %1111 = vmatprep.subr.mxu0 0.0
    %1112 = vmatpush1.msra.mxu0 0.0
    %1113 = vmatprep.subr.mxu0 0.0
    %1114 = vmatpush1.msra.mxu0 0.0
    %1115 = vmatprep.subr.mxu0 0.0
    %1116 = vmatpush1.msra.mxu0 0.0
    %1117 = vmatprep.subr.mxu0 0.0
    %1118 = vmatpush1.msra.mxu0 0.0
    %1119 = vmatprep.subr.mxu0 0.0
    %1120 = vmatpush1.msra.mxu0 0.0
    %1121 = vmatprep.subr.mxu0 0.0
    %1122 = vmatpush1.msra.mxu0 0.0
    %1123 = vmatprep.mubr.f32.mxu0 0.0
    %v1124 = vand.u32 %v696, 4294901760
    %v1125 = vsub.f32 %v696, %v1124
    %v1126 = vand.u32 %v1125, 4294901760
    %1127 = vmatmul.mubr.f32.gmra.mrb[0].mxu0 %v1126
    %v1128 = vpop.f32.mrb[0].mxu0
    %v1129 = vadd.f32 %v1040, %v1128
    %v1130 = vpop.f32.mrb[0].mxu0
    %1131 = vdwg.mxu0
    %1132 = vmatprep.subr.mxu0 0.0
    %v1133 = vand.u32 %v39, 4294901760
    %v1134 = vsub.f32 %v39, %v1133
    %v1135 = vand.u32 %v1134, 4294901760
    %1136 = vmatpush1.msra.mxu0 %v1135
    %1137 = vmatprep.subr.mxu0 0.0
    %v1138 = vand.u32 %v40, 4294901760
    %v1139 = vsub.f32 %v40, %v1138
    %v1140 = vand.u32 %v1139, 4294901760
    %1141 = vmatpush1.msra.mxu0 %v1140
    %1142 = vmatprep.subr.mxu0 0.0
    %v1143 = vand.u32 %v41, 4294901760
    %v1144 = vsub.f32 %v41, %v1143
    %v1145 = vand.u32 %v1144, 4294901760
    %1146 = vmatpush1.msra.mxu0 %v1145
    %1147 = vmatprep.subr.mxu0 0.0
    %v1148 = vand.u32 %v42, 4294901760
    %v1149 = vsub.f32 %v42, %v1148
    %v1150 = vand.u32 %v1149, 4294901760
    %1151 = vmatpush1.msra.mxu0 %v1150
    %1152 = vmatprep.subr.mxu0 0.0
    %v1153 = vand.u32 %v43, 4294901760
    %v1154 = vsub.f32 %v43, %v1153
    %v1155 = vand.u32 %v1154, 4294901760
    %1156 = vmatpush1.msra.mxu0 %v1155
    %1157 = vmatprep.subr.mxu0 0.0
    %v1158 = vand.u32 %v44, 4294901760
    %v1159 = vsub.f32 %v44, %v1158
    %v1160 = vand.u32 %v1159, 4294901760
    %1161 = vmatpush1.msra.mxu0 %v1160
    %1162 = vmatprep.subr.mxu0 0.0
    %v1163 = vand.u32 %v45, 4294901760
    %v1164 = vsub.f32 %v45, %v1163
    %v1165 = vand.u32 %v1164, 4294901760
    %1166 = vmatpush1.msra.mxu0 %v1165
    %1167 = vmatprep.subr.mxu0 0.0
    %v1168 = vand.u32 %v46, 4294901760
    %v1169 = vsub.f32 %v46, %v1168
    %v1170 = vand.u32 %v1169, 4294901760
    %1171 = vmatpush1.msra.mxu0 %v1170
    %1172 = vmatprep.subr.mxu0 0.0
    %v1173 = vand.u32 %v47, 4294901760
    %v1174 = vsub.f32 %v47, %v1173
    %v1175 = vand.u32 %v1174, 4294901760
    %1176 = vmatpush1.msra.mxu0 %v1175
    %1177 = vmatprep.subr.mxu0 0.0
    %v1178 = vand.u32 %v48, 4294901760
    %v1179 = vsub.f32 %v48, %v1178
    %v1180 = vand.u32 %v1179, 4294901760
    %1181 = vmatpush1.msra.mxu0 %v1180
    %1182 = vmatprep.subr.mxu0 0.0
    %v1183 = vand.u32 %v49, 4294901760
    %v1184 = vsub.f32 %v49, %v1183
    %v1185 = vand.u32 %v1184, 4294901760
    %1186 = vmatpush1.msra.mxu0 %v1185
    %1187 = vmatprep.subr.mxu0 0.0
    %v1188 = vand.u32 %v50, 4294901760
    %v1189 = vsub.f32 %v50, %v1188
    %v1190 = vand.u32 %v1189, 4294901760
    %1191 = vmatpush1.msra.mxu0 %v1190
    %1192 = vmatprep.subr.mxu0 0.0
    %v1193 = vand.u32 %v51, 4294901760
    %v1194 = vsub.f32 %v51, %v1193
    %v1195 = vand.u32 %v1194, 4294901760
    %1196 = vmatpush1.msra.mxu0 %v1195
    %1197 = vmatprep.subr.mxu0 0.0
    %v1198 = vand.u32 %v52, 4294901760
    %v1199 = vsub.f32 %v52, %v1198
    %v1200 = vand.u32 %v1199, 4294901760
    %1201 = vmatpush1.msra.mxu0 %v1200
    %1202 = vmatprep.subr.mxu0 0.0
    %v1203 = vand.u32 %v53, 4294901760
    %v1204 = vsub.f32 %v53, %v1203
    %v1205 = vand.u32 %v1204, 4294901760
    %1206 = vmatpush1.msra.mxu0 %v1205
    %1207 = vmatprep.subr.mxu0 0.0
    %v1208 = vand.u32 %v54, 4294901760
    %v1209 = vsub.f32 %v54, %v1208
    %v1210 = vand.u32 %v1209, 4294901760
    %1211 = vmatpush1.msra.mxu0 %v1210
    %1212 = vmatprep.subr.mxu0 0.0
    %1213 = vmatpush1.msra.mxu0 0.0
    %1214 = vmatprep.subr.mxu0 0.0
    %1215 = vmatpush1.msra.mxu0 0.0
    %1216 = vmatprep.subr.mxu0 0.0
    %1217 = vmatpush1.msra.mxu0 0.0
    %1218 = vmatprep.subr.mxu0 0.0
    %1219 = vmatpush1.msra.mxu0 0.0
    %1220 = vmatprep.subr.mxu0 0.0
    %1221 = vmatpush1.msra.mxu0 0.0
    %1222 = vmatprep.subr.mxu0 0.0
    %1223 = vmatpush1.msra.mxu0 0.0
    %1224 = vmatprep.subr.mxu0 0.0
    %1225 = vmatpush1.msra.mxu0 0.0
    %1226 = vmatprep.subr.mxu0 0.0
    %1227 = vmatpush1.msra.mxu0 0.0
    %1228 = vmatprep.subr.mxu0 0.0
    %1229 = vmatpush1.msra.mxu0 0.0
    %1230 = vmatprep.subr.mxu0 0.0
    %1231 = vmatpush1.msra.mxu0 0.0
    %1232 = vmatprep.subr.mxu0 0.0
    %1233 = vmatpush1.msra.mxu0 0.0
    %1234 = vmatprep.subr.mxu0 0.0
    %1235 = vmatpush1.msra.mxu0 0.0
    %1236 = vmatprep.subr.mxu0 0.0
    %1237 = vmatpush1.msra.mxu0 0.0
    %1238 = vmatprep.subr.mxu0 0.0
    %1239 = vmatpush1.msra.mxu0 0.0
    %1240 = vmatprep.subr.mxu0 0.0
    %1241 = vmatpush1.msra.mxu0 0.0
    %1242 = vmatprep.subr.mxu0 0.0
    %1243 = vmatpush1.msra.mxu0 0.0
    %1244 = vmatprep.mubr.f32.mxu0 0.0
    %v1245 = vand.u32 %v696, 4294901760
    %1246 = vmatmul.mubr.f32.gmra.mrb[0].mxu0 %v1245
    %v1247 = vpop.f32.mrb[0].mxu0
    %v1248 = vadd.f32 %v1129, %v1247
    %v1249 = vpop.f32.mrb[0].mxu0
    %1250 = vdwg.mxu0
    %1251 = vmatprep.subr.mxu0 0.0
    %v1252 = vand.u32 %v39, 4294901760
    %1253 = vmatpush1.msra.mxu0 %v1252
    %1254 = vmatprep.subr.mxu0 0.0
    %v1255 = vand.u32 %v40, 4294901760
    %1256 = vmatpush1.msra.mxu0 %v1255
    %1257 = vmatprep.subr.mxu0 0.0
    %v1258 = vand.u32 %v41, 4294901760
    %1259 = vmatpush1.msra.mxu0 %v1258
    %1260 = vmatprep.subr.mxu0 0.0
    %v1261 = vand.u32 %v42, 4294901760
    %1262 = vmatpush1.msra.mxu0 %v1261
    %1263 = vmatprep.subr.mxu0 0.0
    %v1264 = vand.u32 %v43, 4294901760
    %1265 = vmatpush1.msra.mxu0 %v1264
    %1266 = vmatprep.subr.mxu0 0.0
    %v1267 = vand.u32 %v44, 4294901760
    %1268 = vmatpush1.msra.mxu0 %v1267
    %1269 = vmatprep.subr.mxu0 0.0
    %v1270 = vand.u32 %v45, 4294901760
    %1271 = vmatpush1.msra.mxu0 %v1270
    %1272 = vmatprep.subr.mxu0 0.0
    %v1273 = vand.u32 %v46, 4294901760
    %1274 = vmatpush1.msra.mxu0 %v1273
    %1275 = vmatprep.subr.mxu0 0.0
    %v1276 = vand.u32 %v47, 4294901760
    %1277 = vmatpush1.msra.mxu0 %v1276
    %1278 = vmatprep.subr.mxu0 0.0
    %v1279 = vand.u32 %v48, 4294901760
    %1280 = vmatpush1.msra.mxu0 %v1279
    %1281 = vmatprep.subr.mxu0 0.0
    %v1282 = vand.u32 %v49, 4294901760
    %1283 = vmatpush1.msra.mxu0 %v1282
    %1284 = vmatprep.subr.mxu0 0.0
    %v1285 = vand.u32 %v50, 4294901760
    %1286 = vmatpush1.msra.mxu0 %v1285
    %1287 = vmatprep.subr.mxu0 0.0
    %v1288 = vand.u32 %v51, 4294901760
    %1289 = vmatpush1.msra.mxu0 %v1288
    %1290 = vmatprep.subr.mxu0 0.0
    %v1291 = vand.u32 %v52, 4294901760
    %1292 = vmatpush1.msra.mxu0 %v1291
    %1293 = vmatprep.subr.mxu0 0.0
    %v1294 = vand.u32 %v53, 4294901760
    %1295 = vmatpush1.msra.mxu0 %v1294
    %1296 = vmatprep.subr.mxu0 0.0
    %v1297 = vand.u32 %v54, 4294901760
    %1298 = vmatpush1.msra.mxu0 %v1297
    %1299 = vmatprep.subr.mxu0 0.0
    %1300 = vmatpush1.msra.mxu0 0.0
    %1301 = vmatprep.subr.mxu0 0.0
    %1302 = vmatpush1.msra.mxu0 0.0
    %1303 = vmatprep.subr.mxu0 0.0
    %1304 = vmatpush1.msra.mxu0 0.0
    %1305 = vmatprep.subr.mxu0 0.0
    %1306 = vmatpush1.msra.mxu0 0.0
    %1307 = vmatprep.subr.mxu0 0.0
    %1308 = vmatpush1.msra.mxu0 0.0
    %1309 = vmatprep.subr.mxu0 0.0
    %1310 = vmatpush1.msra.mxu0 0.0
    %1311 = vmatprep.subr.mxu0 0.0
    %1312 = vmatpush1.msra.mxu0 0.0
    %1313 = vmatprep.subr.mxu0 0.0
    %1314 = vmatpush1.msra.mxu0 0.0
    %1315 = vmatprep.subr.mxu0 0.0
    %1316 = vmatpush1.msra.mxu0 0.0
    %1317 = vmatprep.subr.mxu0 0.0
    %1318 = vmatpush1.msra.mxu0 0.0
    %1319 = vmatprep.subr.mxu0 0.0
    %1320 = vmatpush1.msra.mxu0 0.0
    %1321 = vmatprep.subr.mxu0 0.0
    %1322 = vmatpush1.msra.mxu0 0.0
    %1323 = vmatprep.subr.mxu0 0.0
    %1324 = vmatpush1.msra.mxu0 0.0
    %1325 = vmatprep.subr.mxu0 0.0
    %1326 = vmatpush1.msra.mxu0 0.0
    %1327 = vmatprep.subr.mxu0 0.0
    %1328 = vmatpush1.msra.mxu0 0.0
    %1329 = vmatprep.subr.mxu0 0.0
    %1330 = vmatpush1.msra.mxu0 0.0
    %1331 = vmatprep.mubr.f32.mxu0 0.0
    %v1332 = vand.u32 %v696, 4294901760
    %1333 = vmatmul.mubr.f32.gmra.mrb[0].mxu0 %v1332
    %v1334 = vpop.f32.mrb[0].mxu0
    %v1335 = vadd.f32 %v1248, %v1334
    %v1336 = vpop.f32.mrb[0].mxu0
    %1337 = vdwg.mxu0
    %v1338 = vmul.f32 %v693, %v693
    %v1339 = vsub.f32 %v1335, %v1338
    %v1340 = vmax.f32 %v1339, 0.0
    %v1341 = vadd.f32 %v1340, 1e-05
    %v1342 = vrsqrt.pop %v1341
    %v1343 = vsub.f32 %v38, %v693
    %v1344 = vmul.f32 %v1343, %v1342
    %1345 = vst [vmem:[#allocation7] sm:$0xf] %v1344
    // Predicated region
    $region18: #{tpu_custom_call.1} parent=1 // pred_check
      _
    $region19: #{tpu_custom_call.1} parent=1 // pred_check_branch
      %1347 = sbr.rel (0) target = $region21
    $region20: #{tpu_custom_call.1} parent=1 // pred_region
      %s1349 = ssub.s32 64, 64
      %1350 = vsyncadd [#allocation4], %s1349
      %s1352 = sshll.u32 [#allocation7], 4
      %s1353 = int_to_ptr.vmem [resolvable:$true] %s1352
      %1355 = dma.vmem_to_hbm [thread:$0]  %s1353, 64, %s2, [#allocation4]
    $region21: #{tpu_custom_call.1} parent=1 // pred_fallthru
      _
    // Predicated region
    $region22: #{tpu_custom_call.1} parent=1 // pred_check
      _
    $region23: #{tpu_custom_call.1} parent=1 // pred_check_branch
      %1357 = sbr.rel (0) target = $region25
    $region24: #{tpu_custom_call.1} parent=1 // pred_region
      %1358 = dma.done [#allocation4], 64
    $region25: #{tpu_custom_call.1} parent=1 // pred_fallthru
      _
    %1359 = vsyncpa [#allocation3], 1
    %1360 = vsyncpa [#allocation6], 1
    %1361 = vsyncpa [#allocation4], 1

</llo_original>
